<compile_context>
chip_gen: v6e
topology: v6e:2x2x1
jax: 0.10.0
libtpu: 0.0.40
codegen_flags: <defaults>
</compile_context>

<pallas_src>
import jax
import jax.numpy as jnp
from jax import lax
from jax.experimental import pallas as pl
from jax.experimental.pallas import tpu as pltpu

SLOPE = 0.1            # negative_slope of LeakyReLU
LANES = 128            # vreg lane width (v5e/v6e/v7x)
SUBLANES = 8           # f32 sublanes per vreg
MAX_BLOCK_ROWS = 4096  # 4096 * 128 * 4 B = 2 MiB per f32 block per plane
_JNP_FALLBACK_ELEMS = 512  # below this, plain jnp beats a kernel launch
                           # (raise to ~64K in production; kept tiny here so the
                           #  demo shapes exercise the Pallas path)


def _cdiv(a: int, b: int) -> int:
    return -(-a // b)


def _leaky_relu_pair_kernel(xr_ref, xi_ref, or_ref, oi_ref):
    """Elementwise LeakyReLU on lane-dense f32 tiles of the real & imag planes."""
    xr = xr_ref[...]
    xi = xi_ref[...]
    # SLOPE < 1  =>  max(x, SLOPE*x) == LeakyReLU(x); 2 VALU ops per vreg.
    or_ref[...] = jnp.maximum(xr, SLOPE * xr)
    oi_ref[...] = jnp.maximum(xi, SLOPE * xi)


def _choose_block_rows(rows: int) -> int:
    if rows <= SUBLANES:
        return rows  # single (possibly partial) block == full extent
    # Aim for >= 2 grid steps (both v7x TCs busy); rows a multiple of 8 sublanes;
    # capped at 2 MiB/block so 4 refs x 2 buffers = 16 MiB VMEM on every generation.
    half = _cdiv(_cdiv(rows, 2), SUBLANES) * SUBLANES
    return min(MAX_BLOCK_ROWS, half)


def _complex_leaky_relu(x: jax.Array) -> jax.Array:
    """x: complex64 array (any shape). Returns LeakyReLU(Re(x)) + 1j*LeakyReLU(Im(x))."""
    shape = x.shape
    n = x.size

    xr = jnp.real(x)
    xi = jnp.imag(x)

    if n < _JNP_FALLBACK_ELEMS:
        # Kernel-launch overhead dominates for tiny inputs.
        return lax.complex(jnp.maximum(xr, SLOPE * xr), jnp.maximum(xi, SLOPE * xi))

    rows = _cdiv(n, LANES)
    tail = rows * LANES - n            # < 128 elements

    xr_flat = xr.reshape(-1)
    xi_flat = xi.reshape(-1)
    if tail:
        # Lane-tail pad only; fuses with the real/imag extraction pass above.
        xr_flat = jnp.pad(xr_flat, (0, tail))
        xi_flat = jnp.pad(xi_flat, (0, tail))
    xr_planar = xr_flat.reshape(rows, LANES)
    xi_planar = xi_flat.reshape(rows, LANES)

    block_rows = _choose_block_rows(rows)
    grid = (_cdiv(rows, block_rows),)
    spec = pl.BlockSpec((block_rows, LANES), lambda i: (i, 0))

    out_r, out_i = pl.pallas_call(
        _leaky_relu_pair_kernel,
        out_shape=(
            jax.ShapeDtypeStruct((rows, LANES), jnp.float32),
            jax.ShapeDtypeStruct((rows, LANES), jnp.float32),
        ),
        grid=grid,
        in_specs=[spec, spec],
        out_specs=(spec, spec),
        input_output_aliases={0: 0, 1: 1},   # donate the planar f32 buffers
        compiler_params=pltpu.CompilerParams(
            dimension_semantics=("parallel",),
            vmem_limit_bytes=32 * 1024 * 1024,
        ),
        cost_estimate=pl.CostEstimate(
            flops=4 * rows * LANES,                 # 2 VALU ops / element / plane
            transcendentals=0,
            bytes_accessed=4 * rows * LANES * 4,    # 2 in + 2 out, f32
        ),
    )(xr_planar, xi_planar)

    out_r_flat = out_r.reshape(-1)
    out_i_flat = out_i.reshape(-1)
    if tail:
        # Slices fuse into the complex-reconstruction pass below.
        out_r_flat = out_r_flat[:n]
        out_i_flat = out_i_flat[:n]
    # TODO(synk): a zero-copy complex<->f32 bitcast is not expressible (Mosaic has no
    # complex refs; lax.bitcast_convert_type rejects complex), so the split/recombine
    # stays in XLA.
    return lax.complex(out_r_flat.reshape(shape), out_i_flat.reshape(shape))


complex_leaky_relu = jax.jit(_complex_leaky_relu)


if __name__ == "__main__":
    def _ref(x):
        def lrelu(v):
            return jnp.where(v >= 0, v, SLOPE * v)
        return lax.complex(lrelu(jnp.real(x)), lrelu(jnp.imag(x)))

    key = jax.random.PRNGKey(0)
    k0, k1, k2, k3 = jax.random.split(key, 4)

    # Primary shape from the module spec: (B=2, C=4, H=16, W=16) complex64.
    shape = (2, 4, 16, 16)   # 2048 elems -> 16 rows of 128, block_rows=8, grid=2
    x = lax.complex(jax.random.normal(k0, shape, dtype=jnp.float32),
                    jax.random.normal(k1, shape, dtype=jnp.float32))
    out = jax.block_until_ready(complex_leaky_relu(x))
    assert out.shape == shape and out.dtype == jnp.complex64
    assert jnp.allclose(out, _ref(x), atol=1e-6, rtol=1e-6)

    # Ragged shape: exercises the partial last block and the <128-lane tail path.
    shape2 = (3, 5, 7, 11)   # 1155 elems -> 10 rows (+125-elem tail pad), grid=2
    x2 = lax.complex(jax.random.normal(k2, shape2, dtype=jnp.float32),
                     jax.random.normal(k3, shape2, dtype=jnp.float32))
    out2 = jax.block_until_ready(complex_leaky_relu(x2))
    assert out2.shape == shape2 and out2.dtype == jnp.complex64
    assert jnp.allclose(out2, _ref(x2), atol=1e-6, rtol=1e-6)

    print("KERNEL_OK")
</pallas_src>

<mosaic_0001>
module attributes {stable_mosaic.version = 11 : i64} {
  func.func @_leaky_relu_pair_kernel(%arg0: i32, %arg1: memref<8x128xf32, #tpu.memory_space<vmem>>, %arg2: memref<8x128xf32, #tpu.memory_space<vmem>>, %arg3: memref<8x128xf32, #tpu.memory_space<vmem>>, %arg4: memref<8x128xf32, #tpu.memory_space<vmem>>) attributes {dimension_semantics = [#tpu.dimension_semantics<parallel>], iteration_bounds = array<i64: 2>, scalar_prefetch = 0 : i64, scratch_operands = 0 : i64, tpu.core_type = #tpu.core_type<tc>, window_params = [{transform_indices = @transform_0, window_bounds = array<i64: 8, 128>}, {transform_indices = @transform_1, window_bounds = array<i64: 8, 128>}, {transform_indices = @transform_2, window_bounds = array<i64: 8, 128>}, {transform_indices = @transform_3, window_bounds = array<i64: 8, 128>}]} {
    %c0 = arith.constant 0 : index
    %c0_0 = arith.constant 0 : index
    %0 = vector.load %arg1[%c0, %c0_0] : memref<8x128xf32, #tpu.memory_space<vmem>>, vector<8x128xf32>
    %c0_1 = arith.constant 0 : index
    %c0_2 = arith.constant 0 : index
    %1 = vector.load %arg2[%c0_1, %c0_2] : memref<8x128xf32, #tpu.memory_space<vmem>>, vector<8x128xf32>
    %cst = arith.constant 1.000000e-01 : f32
    %2 = vector.broadcast %cst : f32 to vector<8x128xf32>
    %3 = arith.mulf %2, %0 : vector<8x128xf32>
    %4 = arith.maximumf %0, %3 : vector<8x128xf32>
    %c0_3 = arith.constant 0 : index
    %c0_4 = arith.constant 0 : index
    %5 = vector.load %arg3[%c0_3, %c0_4] : memref<8x128xf32, #tpu.memory_space<vmem>>, vector<8x128xf32>
    tpu.vector_store %arg3[%c0_3, %c0_4], %4 {strides = array<i32>} : memref<8x128xf32, #tpu.memory_space<vmem>>, vector<8x128xf32>,
    %cst_5 = arith.constant 1.000000e-01 : f32
    %6 = vector.broadcast %cst_5 : f32 to vector<8x128xf32>
    %7 = arith.mulf %6, %1 : vector<8x128xf32>
    %8 = arith.maximumf %1, %7 : vector<8x128xf32>
    %c0_6 = arith.constant 0 : index
    %c0_7 = arith.constant 0 : index
    %9 = vector.load %arg4[%c0_6, %c0_7] : memref<8x128xf32, #tpu.memory_space<vmem>>, vector<8x128xf32>
    tpu.vector_store %arg4[%c0_6, %c0_7], %8 {strides = array<i32>} : memref<8x128xf32, #tpu.memory_space<vmem>>, vector<8x128xf32>,
    return
  }
  func.func @transform_0(%arg0: i32) -> (i32, i32) {
    %c0_i32 = arith.constant 0 : i32
    %c0_i32_0 = arith.constant 0 : i32
    return %arg0, %c0_i32 : i32, i32
  }
  func.func @transform_1(%arg0: i32) -> (i32, i32) {
    %c0_i32 = arith.constant 0 : i32
    %c0_i32_0 = arith.constant 0 : i32
    return %arg0, %c0_i32 : i32, i32
  }
  func.func @transform_2(%arg0: i32) -> (i32, i32) {
    %c0_i32 = arith.constant 0 : i32
    %c0_i32_0 = arith.constant 0 : i32
    return %arg0, %c0_i32 : i32, i32
  }
  func.func @transform_3(%arg0: i32) -> (i32, i32) {
    %c0_i32 = arith.constant 0 : i32
    %c0_i32_0 = arith.constant 0 : i32
    return %arg0, %c0_i32 : i32, i32
  }
}

</mosaic_0001>

<llo_original>
// kernel: custom-call.1
$region0: #{custom-call.1}
  %s0 = inlined_call_operand.hbm [shape: c64[2,4,16,16], index: 0, kind: input, shape index: {}]
  %s1 = inlined_call_operand.vmem [shape: f32[2,4,16,16], index: 1, kind: output, shape index: {}]
  %s2 = scalar_lea.hbm %s0, 2048
  $region1: #{custom-call.1} parent=0
    #allocation0 [shape = 's32[1]{0}', space=sflag, size = 0x4, scoped, tag = 'scoped memory for custom-call.1']
    %3 = vsyncpa [#allocation0], 0
    %s4 = sshll.u32 %s1, 4
    %s5 = int_to_ptr.vmem [resolvable:$true] %s4
    %7 = dma.hbm_to_vmem [thread:$0]  %s2, 2048, %s5, [#allocation0]
    %8 = dma.done [#allocation0], 2048
    %9 = vsyncpa [#allocation0], 1

// kernel: custom-call
$region0: #{custom-call}
  %s0 = inlined_call_operand.hbm [shape: c64[2,4,16,16], index: 0, kind: input, shape index: {}]
  %s1 = inlined_call_operand.vmem [shape: f32[2,4,16,16], index: 1, kind: output, shape index: {}]
  $region1: #{custom-call} parent=0
    #allocation0 [shape = 's32[1]{0}', space=sflag, size = 0x4, scoped, tag = 'scoped memory for custom-call']
    %2 = vsyncpa [#allocation0], 0
    %s3 = sshll.u32 %s1, 4
    %s4 = int_to_ptr.vmem [resolvable:$true] %s3
    %6 = dma.hbm_to_vmem [thread:$0]  %s0, 2048, %s4, [#allocation0]
    %7 = dma.done [#allocation0], 2048
    %8 = vsyncpa [#allocation0], 1

// kernel: custom-call.2
$region0: #{custom-call.2}
  %s0 = inlined_call_operand.vmem [shape: f32[2,4,16,16], index: 0, kind: input, shape index: {}]
  %s1 = inlined_call_operand.vmem [shape: f32[2,4,16,16], index: 1, kind: input, shape index: {}]
  %s2 = inlined_call_operand.hbm [shape: c64[2,4,16,16], index: 2, kind: output, shape index: {}]
  %s3 = scalar_lea.hbm %s2, 2048
  $region1: #{custom-call.2} parent=0
    #allocation0 [shape = 's32[1]{0}', space=sflag, size = 0x4, scoped, tag = 'scoped memory for custom-call.2']
    %4 = vsyncpa [#allocation0], 0
    %s5 = sshll.u32 %s0, 4
    %s6 = int_to_ptr.vmem [resolvable:$true] %s5
    %8 = dma.vmem_to_hbm [thread:$0]  %s6, 2048, %s2, [#allocation0]
    %9 = dma.done [#allocation0], 2048
    %10 = vsyncpa [#allocation0], 1
  $region2: #{custom-call.2} parent=0
    #allocation1 [shape = 's32[1]{0}', space=sflag, size = 0x4, scoped, tag = 'scoped memory for custom-call.2']
    %11 = vsyncpa [#allocation1], 0
    %s12 = sshll.u32 %s1, 4
    %s13 = int_to_ptr.vmem [resolvable:$true] %s12
    %15 = dma.vmem_to_hbm [thread:$0]  %s13, 2048, %s3, [#allocation1]
    %16 = dma.done [#allocation1], 2048
    %17 = vsyncpa [#allocation1], 1

// kernel: _complex_leaky_relu.1
$region0: #{_complex_leaky_relu.1}
  #allocation0 [shape = 'u32[]', space=smem, size = 0x4, offset = 0x4, fixed_abs, tag = 'smem constant byte address 0x4 - core index']
  #allocation1 [shape = 'u32[144,128]{1,0:T(1,128)}', space=vmem, size = 0x12000, scoped, tag = 'internal scratch']
  %s0 = inlined_call_operand.vmem [shape: f32[16,128], index: 0, kind: input, shape index: {}, may-alias: {0,2}]
  %s1 = inlined_call_operand.vmem [shape: f32[16,128], index: 1, kind: input, shape index: {}, may-alias: {1,3}]
  %s2 = inlined_call_operand.vmem [shape: f32[16,128], index: 2, kind: output, shape index: {0}, may-alias: {0,2}]
  %s3 = inlined_call_operand.vmem [shape: f32[16,128], index: 3, kind: output, shape index: {1}, may-alias: {1,3}]
  %4 = xla_tuple %s2, %s3
  %s5 = sld [smem:[#allocation0]]
  $region49: #{_complex_leaky_relu.1} parent=0
    _
  %s7 = ssub.s32 1, %s5
  %s8 = scalar_select 0, %s7, %s5
  loop: start=0, step=1, limit=4
  $region2: #{_complex_leaky_relu.1} parent=0 // loop_pre_header
    _
  $region3: #{_complex_leaky_relu.1} parent=0 // loop_header
    %s10 = sphi 0, %s14
    %p11 = scmp.ge.s32.totalorder %s10, 4
    %s20 = sphi 0, %s22
    %s23 = sphi 0, %s20
    %s24 = sphi 0, %s23
    %s40 = sphi 0, %s24
    %s46 = sphi 0, %s48
    %s49 = sphi 0, %s46
    %s50 = sphi 0, %s49
    %s66 = sphi 0, %s50
    %s72 = sphi 0, %s74
    %s75 = sphi 0, %s72
    %s76 = sphi 0, %s75
    %s92 = sphi 0, %s76
    %s98 = sphi 0, %s100
    %s101 = sphi 0, %s98
    %s102 = sphi 0, %s101
    %s118 = sphi 0, %s102
  $region4: #{_complex_leaky_relu.1} parent=0 // loop_header_branch
    %13 = sbr.rel (%p11) target = $region8
  $region5: #{_complex_leaky_relu.1} parent=0 // loop_body
    %s15 = ssub.s32 %s10, 1
    %s16 = ssub.s32 %s10, 2
    %s17 = sadd.s32 %s10, 1
    %s18 = ssub.s32 %s10, %s17
    %p19 = scmp.eq.s32.totalorder %s18, 0
    %s21 = sadd.s32 %s20, 1
    %s22 = scalar_select %p19, %s20, %s21
    %p25 = pneg %p19
    %p26 = scmp.eq.s32.totalorder %s10, 1
    %p27 = por %p25, %p26
    %p28 = scmp.ne.s32.totalorder %s20, %s23
    %p29 = scmp.eq.s32.totalorder %s10, 0
    %p30 = por %p28, %p29
    %p31 = scmp.ne.s32.totalorder %s20, %s23
    %p32 = scmp.eq.s32.totalorder %s15, 1
    %p33 = por %p31, %p32
    %p34 = scmp.ne.s32.totalorder %s23, %s24
    %p35 = scmp.eq.s32.totalorder %s15, 0
    %p36 = por %p34, %p35
    %p37 = scmp.ne.s32.totalorder %s23, %s24
    %p38 = scmp.eq.s32.totalorder %s16, 1
    %p39 = por %p37, %p38
    %p41 = scmp.ne.s32.totalorder %s24, %s40
    %p42 = scmp.eq.s32.totalorder %s16, 0
    %p43 = por %p41, %p42
    %s44 = ssub.s32 %s10, %s17
    %p45 = scmp.eq.s32.totalorder %s44, 0
    %s47 = sadd.s32 %s46, 1
    %s48 = scalar_select %p45, %s46, %s47
    %p51 = pneg %p45
    %p52 = scmp.eq.s32.totalorder %s10, 1
    %p53 = por %p51, %p52
    %p54 = scmp.ne.s32.totalorder %s46, %s49
    %p55 = scmp.eq.s32.totalorder %s10, 0
    %p56 = por %p54, %p55
    %p57 = scmp.ne.s32.totalorder %s46, %s49
    %p58 = scmp.eq.s32.totalorder %s15, 1
    %p59 = por %p57, %p58
    %p60 = scmp.ne.s32.totalorder %s49, %s50
    %p61 = scmp.eq.s32.totalorder %s15, 0
    %p62 = por %p60, %p61
    %p63 = scmp.ne.s32.totalorder %s49, %s50
    %p64 = scmp.eq.s32.totalorder %s16, 1
    %p65 = por %p63, %p64
    %p67 = scmp.ne.s32.totalorder %s50, %s66
    %p68 = scmp.eq.s32.totalorder %s16, 0
    %p69 = por %p67, %p68
    %s70 = ssub.s32 %s10, %s17
    %p71 = scmp.eq.s32.totalorder %s70, 0
    %s73 = sadd.s32 %s72, 1
    %s74 = scalar_select %p71, %s72, %s73
    %p77 = pneg %p71
    %p78 = scmp.eq.s32.totalorder %s10, 1
    %p79 = por %p77, %p78
    %p80 = scmp.ne.s32.totalorder %s72, %s75
    %p81 = scmp.eq.s32.totalorder %s10, 0
    %p82 = por %p80, %p81
    %p83 = scmp.ne.s32.totalorder %s72, %s75
    %p84 = scmp.eq.s32.totalorder %s15, 1
    %p85 = por %p83, %p84
    %p86 = scmp.ne.s32.totalorder %s75, %s76
    %p87 = scmp.eq.s32.totalorder %s15, 0
    %p88 = por %p86, %p87
    %p89 = scmp.ne.s32.totalorder %s75, %s76
    %p90 = scmp.eq.s32.totalorder %s16, 1
    %p91 = por %p89, %p90
    %p93 = scmp.ne.s32.totalorder %s76, %s92
    %p94 = scmp.eq.s32.totalorder %s16, 0
    %p95 = por %p93, %p94
    %s96 = ssub.s32 %s10, %s17
    %p97 = scmp.eq.s32.totalorder %s96, 0
    %s99 = sadd.s32 %s98, 1
    %s100 = scalar_select %p97, %s98, %s99
    %p103 = pneg %p97
    %p104 = scmp.eq.s32.totalorder %s10, 1
    %p105 = por %p103, %p104
    %p106 = scmp.ne.s32.totalorder %s98, %s101
    %p107 = scmp.eq.s32.totalorder %s10, 0
    %p108 = por %p106, %p107
    %p109 = scmp.ne.s32.totalorder %s98, %s101
    %p110 = scmp.eq.s32.totalorder %s15, 1
    %p111 = por %p109, %p110
    %p112 = scmp.ne.s32.totalorder %s101, %s102
    %p113 = scmp.eq.s32.totalorder %s15, 0
    %p114 = por %p112, %p113
    %p115 = scmp.ne.s32.totalorder %s101, %s102
    %p116 = scmp.eq.s32.totalorder %s16, 1
    %p117 = por %p115, %p116
    %p119 = scmp.ne.s32.totalorder %s102, %s118
    %p120 = scmp.eq.s32.totalorder %s16, 0
    %p121 = por %p119, %p120
    %p122 = scmp.le.s32.totalorder 1, %s10
    %p123 = scmp.lt.s32.totalorder %s10, 3
    %p124 = pnand %p122, %p123
    %p125 = pneg %p124
    // Predicated region
    $region9: #{_complex_leaky_relu.1} parent=5 // pred_check
      _
    $region10: #{_complex_leaky_relu.1} parent=5 // pred_check_branch
      %127 = sbr.rel (%p124) target = $region12
    $region11: #{_complex_leaky_relu.1} parent=5 // pred_region
      %s128 = ssub.s32 %s10, 1
    $region12: #{_complex_leaky_relu.1} parent=5 // pred_fallthru
      _
    %p129 = scmp.lt.s32.totalorder %s10, 2
    // Predicated region
    $region13: #{_complex_leaky_relu.1} parent=5 // pred_check
      %p130 = pneg %p129
    $region14: #{_complex_leaky_relu.1} parent=5 // pred_check_branch
      %132 = sbr.rel (%p130) target = $region16
    $region15: #{_complex_leaky_relu.1} parent=5 // pred_region
      // Predicated region
      $region17: #{_complex_leaky_relu.1} parent=15 // pred_check
        %p133 = pneg %p30
      $region18: #{_complex_leaky_relu.1} parent=15 // pred_check_branch
        %135 = sbr.rel (%p133) target = $region20
      $region19: #{_complex_leaky_relu.1} parent=15 // pred_region
        %p136 = scmp.lt.s32.totalorder %s10, 1
        %s137 = scalar_select %p136, %s10, 1
        %s138 = smul.addr %s137, 8
        %s139 = scalar_lea.vmem %s0, %s138
      $region20: #{_complex_leaky_relu.1} parent=15 // pred_fallthru
        _
      // Predicated region
      $region21: #{_complex_leaky_relu.1} parent=15 // pred_check
        %p140 = pneg %p56
      $region22: #{_complex_leaky_relu.1} parent=15 // pred_check_branch
        %142 = sbr.rel (%p140) target = $region24
      $region23: #{_complex_leaky_relu.1} parent=15 // pred_region
        %p143 = scmp.lt.s32.totalorder %s10, 1
        %s144 = scalar_select %p143, %s10, 1
        %s145 = smul.addr %s144, 8
        %s146 = scalar_lea.vmem %s1, %s145
      $region24: #{_complex_leaky_relu.1} parent=15 // pred_fallthru
        _
    $region16: #{_complex_leaky_relu.1} parent=5 // pred_fallthru
      _
    %p147 = scmp.le.s32.totalorder 1, %s10
    %p148 = scmp.lt.s32.totalorder %s10, 3
    %p149 = pnand %p147, %p148
    %p150 = pneg %p149
    // Predicated region
    $region25: #{_complex_leaky_relu.1} parent=5 // pred_check
      _
    $region26: #{_complex_leaky_relu.1} parent=5 // pred_check_branch
      %152 = sbr.rel (%p149) target = $region28
    $region27: #{_complex_leaky_relu.1} parent=5 // pred_region
      %s153 = ssub.s32 %s10, 1
      %p154 = scmp.lt.s32.totalorder %s15, 1
      %s155 = scalar_select %p154, %s15, 1
      %s156 = smul.addr %s155, 8
      %s157 = scalar_lea.vmem %s0, %s156
      %p158 = pneg %p36
      %p159 = pneg %p33
      %p160 = scmp.lt.s32.totalorder %s15, 1
      %s161 = scalar_select %p160, %s15, 1
      %s162 = smul.addr %s161, 8
      %s163 = scalar_lea.vmem %s1, %s162
      %p164 = pneg %p62
      %p165 = pneg %p59
      %p166 = pneg %p88
      %p167 = pneg %p85
      %p168 = scmp.lt.s32.totalorder %s15, 1
      %s169 = scalar_select %p168, %s15, 1
      %s170 = smul.addr %s169, 8
      %s171 = scalar_lea.vmem %s2, %s170
      %p172 = pneg %p114
      %p173 = pneg %p111
      %p174 = scmp.lt.s32.totalorder %s15, 1
      %s175 = scalar_select %p174, %s15, 1
      %s176 = smul.addr %s175, 8
      %s177 = scalar_lea.vmem %s3, %s176
      %p178 = scmp.lt.s32.totalorder %s15, 1
      %s179 = scalar_select %p178, %s15, 1
      %s180 = smul.addr %s179, 8
      %s181 = scalar_lea.vmem %s0, %s180
      %p182 = scmp.lt.s32.totalorder %s15, 1
      %s183 = scalar_select %p182, %s15, 1
      %s184 = smul.addr %s183, 8
      %s185 = scalar_lea.vmem %s1, %s184
      %p186 = scmp.lt.s32.totalorder %s15, 1
      %s187 = scalar_select %p186, %s15, 1
      %s188 = smul.addr %s187, 8
      %s189 = scalar_lea.vmem %s2, %s188
      %p190 = scmp.lt.s32.totalorder %s15, 1
      %s191 = scalar_select %p190, %s15, 1
      %s192 = smul.addr %s191, 8
      %s193 = scalar_lea.vmem %s3, %s192
      %v194 = vld [vmem:[%s181] sm:$0xff]
      %v195 = vld [vmem:[%s185] sm:$0xff]
      %v196 = vmul.f32 %v194, 0.1
      %v197 = vmax.f32 %v194, %v196
      %198 = vst [vmem:[%s189] sm:$0xff] %v197
      %v199 = vmul.f32 %v195, 0.1
      %v200 = vmax.f32 %v195, %v199
      %201 = vst [vmem:[%s193] sm:$0xff] %v200
      %p202 = scmp.lt.s32.totalorder %s15, 1
      %s203 = scalar_select %p202, %s15, 1
      %s204 = smul.addr %s203, 8
      %s205 = scalar_lea.vmem %s2, %s204
      %p206 = scmp.lt.s32.totalorder %s15, 1
      %s207 = scalar_select %p206, %s15, 1
      %s208 = smul.addr %s207, 8
      %s209 = scalar_lea.vmem %s3, %s208
      // Predicated region
      $region29: #{_complex_leaky_relu.1} parent=27 // pred_check
        %p210 = pneg %p85
      $region30: #{_complex_leaky_relu.1} parent=27 // pred_check_branch
        %212 = sbr.rel (%p210) target = $region32
      $region31: #{_complex_leaky_relu.1} parent=27 // pred_region
        _
      $region32: #{_complex_leaky_relu.1} parent=27 // pred_fallthru
        _
      // Predicated region
      $region33: #{_complex_leaky_relu.1} parent=27 // pred_check
        %p213 = pneg %p111
      $region34: #{_complex_leaky_relu.1} parent=27 // pred_check_branch
        %215 = sbr.rel (%p213) target = $region36
      $region35: #{_complex_leaky_relu.1} parent=27 // pred_region
        _
      $region36: #{_complex_leaky_relu.1} parent=27 // pred_fallthru
        _
    $region28: #{_complex_leaky_relu.1} parent=5 // pred_fallthru
      _
    %p216 = scmp.le.s32.totalorder 2, %s10
    // Predicated region
    $region37: #{_complex_leaky_relu.1} parent=5 // pred_check
      %p217 = pneg %p216
    $region38: #{_complex_leaky_relu.1} parent=5 // pred_check_branch
      %219 = sbr.rel (%p217) target = $region40
    $region39: #{_complex_leaky_relu.1} parent=5 // pred_region
      %s220 = ssub.s32 %s10, 2
      // Predicated region
      $region41: #{_complex_leaky_relu.1} parent=39 // pred_check
        %p221 = pneg %p91
      $region42: #{_complex_leaky_relu.1} parent=39 // pred_check_branch
        %223 = sbr.rel (%p221) target = $region44
      $region43: #{_complex_leaky_relu.1} parent=39 // pred_region
        %p224 = scmp.lt.s32.totalorder %s16, 1
        %s225 = scalar_select %p224, %s16, 1
        %s226 = smul.addr %s225, 8
        %s227 = scalar_lea.vmem %s2, %s226
      $region44: #{_complex_leaky_relu.1} parent=39 // pred_fallthru
        _
      // Predicated region
      $region45: #{_complex_leaky_relu.1} parent=39 // pred_check
        %p228 = pneg %p117
      $region46: #{_complex_leaky_relu.1} parent=39 // pred_check_branch
        %230 = sbr.rel (%p228) target = $region48
      $region47: #{_complex_leaky_relu.1} parent=39 // pred_region
        %p231 = scmp.lt.s32.totalorder %s16, 1
        %s232 = scalar_select %p231, %s16, 1
        %s233 = smul.addr %s232, 8
        %s234 = scalar_lea.vmem %s3, %s233
      $region48: #{_complex_leaky_relu.1} parent=39 // pred_fallthru
        _
    $region40: #{_complex_leaky_relu.1} parent=5 // pred_fallthru
      _
  $region6: #{_complex_leaky_relu.1} parent=0 // loop_footer
    %s14 = sadd.s32 1, %s10
  $region7: #{_complex_leaky_relu.1} parent=0 // loop_footer_branch
    %9 = sbr.rel target = $region3
  $region8: #{_complex_leaky_relu.1} parent=0 // loop_exit
    _

</llo_original>
